<compile_context>
chip_gen: v6e
topology: v6e:2x2x1
jax: 0.10.0
libtpu: 0.0.40
codegen_flags: <defaults>
</compile_context>

<pallas_src>
import jax
import jax.numpy as jnp
from jax.experimental import pallas as pl
from jax.experimental.pallas import tpu as pltpu

_LANE = 128


def _slog_kernel(d_ref,          # SMEM  [1, 2]   (d1, d2) f32
                 la_ref,         # VMEM  [1, N]   f32 eigenvalues
                 x_ref,          # VMEM  [N, CP]  (lane-padded X)
                 u_ref,          # VMEM  [N, N]
                 ut_ref,         # VMEM  [N, N]   (pre-transposed U^T)
                 w_ref,          # VMEM  [CP, HP] (W weight, transposed + padded)
                 wb_ref,         # VMEM  [1, HP]  f32
                 m_ref,          # VMEM  [HP, OP] (MLP weight, transposed + padded)
                 mb_ref,         # VMEM  [1, OP]  f32 (-1e30 on padded lanes)
                 logp_ref,       # VMEM  [N, OP]  output: log_softmax (padded)
                 hid_ref):       # VMEM  [N, HP]  output: hidden embedding (padded)
    d1 = d_ref[0, 0]
    d2 = d_ref[0, 1]

    la = la_ref[...]                                    # [1, N] f32
    # NOTE: like the PyTorch reference, pow(La, d1) is NaN/inf for La <= 0 with
    # non-integer d1; semantics intentionally preserved (no clamping).
    v1 = jnp.power(la, d1)                              # La ** d1            (EUP)
    v2 = jnp.power((2.0 * (la - 1e-8) - 1.0) ** 2 + 1.0, d2)                # (EUP)

    cdt = u_ref.dtype                                   # matmul-operand dtype
    U = u_ref[...]                                      # [N, N]
    Ut = ut_ref[...]                                    # [N, N]

    # (U diag(v2) U^T) (U diag(v1) U^T) X, evaluated right-to-left so no [N,N]
    # intermediate is ever formed.  Accumulation is always f32.
    t = jnp.dot(Ut, x_ref[...], preferred_element_type=jnp.float32)        # [N, CP]
    t = jnp.dot(U * v1.astype(cdt), t.astype(cdt),
                preferred_element_type=jnp.float32)                        # [N, CP]
    t = jnp.dot(Ut, t.astype(cdt), preferred_element_type=jnp.float32)     # [N, CP]
    out = jnp.dot(U * v2.astype(cdt), t.astype(cdt),
                  preferred_element_type=jnp.float32)                      # [N, CP]

    # W Linear + ReLU (dropout is identity in eval mode).
    h = jnp.dot(out.astype(cdt), w_ref[...],
                preferred_element_type=jnp.float32) + wb_ref[...]          # [N, HP]
    h = jnp.maximum(h, 0.0)
    hid_ref[...] = h                                                       # lane-dense store

    # MLP Linear + log_softmax over dim 1.  Padded class lanes carry a -1e30
    # bias so exp() underflows to 0 and the softmax is exact over the real O.
    logits = jnp.dot(h.astype(cdt), m_ref[...],
                     preferred_element_type=jnp.float32) + mb_ref[...]     # [N, OP]
    mx = jnp.max(logits, axis=-1, keepdims=True)
    sh = logits - mx
    lse = jnp.log(jnp.sum(jnp.exp(sh), axis=-1, keepdims=True))
    logp_ref[...] = sh - lse                                               # lane-dense store


def _round_up(x, m):
    return ((x + m - 1) // m) * m


def _pad_to(x, target, axis, fill=0.0):
    pad = target - x.shape[axis]
    if pad == 0:
        return x
    widths = [(0, 0)] * x.ndim
    widths[axis] = (0, pad)
    return jnp.pad(x, widths, constant_values=fill)


def slog_b_gp_forward(X, La, U, d1, d2, W_w, W_b, M_w, M_b,
                      *, compute_dtype=jnp.float32):
    """X:[N,C], La:[N], U:[N,N]; W_w:[H,C], W_b:[H]; M_w:[O,H], M_b:[O].

    compute_dtype: dtype of MXU operands. Use jnp.bfloat16 on v6e/v7x for
    MXU-native throughput (accumulation stays f32); keep f32 for bit-tight
    results / v5e elementwise.
    """
    N, C = X.shape
    H = W_w.shape[0]
    O = M_w.shape[0]
    CP = _round_up(C, _LANE)
    HP = _round_up(H, _LANE)
    OP = _round_up(O, _LANE)

    f32 = jnp.float32
    d = jnp.array([[d1, d2]], dtype=f32)                        # scalars -> SMEM
    la2d = La.reshape(1, N).astype(f32)

    Uc = U.astype(compute_dtype)
    Utc = U.T.astype(compute_dtype)                             # transpose once, outside
    Xp = _pad_to(X.astype(compute_dtype), CP, axis=1)           # [N, CP]

    W_t = _pad_to(_pad_to(W_w.T.astype(compute_dtype), HP, 1), CP, 0)   # [CP, HP]
    wb = _pad_to(W_b.reshape(1, H).astype(f32), HP, 1)                  # [1, HP]
    M_t = _pad_to(_pad_to(M_w.T.astype(compute_dtype), OP, 1), HP, 0)   # [HP, OP]
    mb = _pad_to(M_b.reshape(1, O).astype(f32), OP, 1, fill=-1e30)      # [1, OP]

    vmem = pl.BlockSpec(memory_space=pltpu.MemorySpace.VMEM)
    smem = pl.BlockSpec(memory_space=pltpu.MemorySpace.SMEM)

    logp_p, hidden_p = pl.pallas_call(
        _slog_kernel,
        out_shape=(
            jax.ShapeDtypeStruct((N, OP), f32),
            jax.ShapeDtypeStruct((N, HP), f32),
        ),
        in_specs=[smem] + [vmem] * 8,
        out_specs=(vmem, vmem),
    )(d, la2d, Xp, Uc, Utc, W_t, wb, M_t, mb)

    # Unpad outside the kernel (cheap XLA slices, fused by the compiler).
    return logp_p[:, :O], hidden_p[:, :H]


def _reference(X, La, U, d1, d2, W_w, W_b, M_w, M_b):
    # Pure-JAX reference in the ORIGINAL PyTorch evaluation order.
    v1 = jnp.power(La, d1)
    v2 = jnp.power((2.0 * (La - 1e-8) - 1.0) ** 2 + 1.0, d2)
    out_A = (U * v1[None, :]) @ U.T
    out_A2 = (U * v2[None, :]) @ U.T
    out = out_A2 @ (out_A @ X)
    h = jnp.maximum(out @ W_w.T + W_b, 0.0)
    logits = h @ M_w.T + M_b
    return jax.nn.log_softmax(logits, axis=1), h


if __name__ == "__main__":
    N, C, H, O = 16, 4, 32, 4          # nodes, in_channels, hidden_dim, out_channels
    key = jax.random.PRNGKey(0)
    k1, k2, k3, k4, k5, k6, k7 = jax.random.split(key, 7)

    X = jax.random.normal(k1, (N, C), dtype=jnp.float32)
    La = jax.random.uniform(k2, (N,), dtype=jnp.float32, minval=0.1, maxval=2.0)
    U = jax.random.normal(k3, (N, N), dtype=jnp.float32) / jnp.sqrt(N)
    d1 = jnp.float32(0.5)
    d2 = jnp.float32(1.5)

    # Deterministic parameter init (synthetic; matches nn.Linear shapes).
    W_w = jax.random.normal(k4, (H, C), dtype=jnp.float32) * 0.1
    W_b = jax.random.normal(k5, (H,), dtype=jnp.float32) * 0.1
    M_w = jax.random.normal(k6, (O, H), dtype=jnp.float32) * 0.1
    M_b = jax.random.normal(k7, (O,), dtype=jnp.float32) * 0.1

    ref_logp, ref_hidden = _reference(X, La, U, d1, d2, W_w, W_b, M_w, M_b)

    # f32 path (default): tight check against the PyTorch-order reference.
    logp, hidden = slog_b_gp_forward(X, La, U, d1, d2, W_w, W_b, M_w, M_b)
    jax.block_until_ready((logp, hidden))
    assert logp.shape == (N, O) and hidden.shape == (N, H)
    assert jnp.allclose(logp, ref_logp, atol=1e-3, rtol=1e-3)
    assert jnp.allclose(hidden, ref_hidden, atol=1e-3, rtol=1e-3)

    # bf16-operand path (v6e/v7x MXU-native); accumulation stays f32, so a
    # loose tolerance against the f32 reference is expected and sufficient.
    logp_bf, hidden_bf = slog_b_gp_forward(
        X, La, U, d1, d2, W_w, W_b, M_w, M_b, compute_dtype=jnp.bfloat16)
    jax.block_until_ready((logp_bf, hidden_bf))
    assert bool(jnp.all(jnp.isfinite(logp_bf))) and bool(jnp.all(jnp.isfinite(hidden_bf)))
    assert jnp.allclose(logp_bf, ref_logp, atol=0.5, rtol=0.2)
    assert jnp.allclose(hidden_bf, ref_hidden, atol=0.5, rtol=0.2)

    print("KERNEL_OK")
</pallas_src>

<mosaic_0001>
module attributes {stable_mosaic.version = 11 : i64} {
  func.func @_slog_kernel(%arg0: memref<1x2xf32, #tpu.memory_space<smem>>, %arg1: memref<1x16xf32, #tpu.memory_space<vmem>>, %arg2: memref<16x128xf32, #tpu.memory_space<vmem>>, %arg3: memref<16x16xf32, #tpu.memory_space<vmem>>, %arg4: memref<16x16xf32, #tpu.memory_space<vmem>>, %arg5: memref<128x128xf32, #tpu.memory_space<vmem>>, %arg6: memref<1x128xf32, #tpu.memory_space<vmem>>, %arg7: memref<128x128xf32, #tpu.memory_space<vmem>>, %arg8: memref<1x128xf32, #tpu.memory_space<vmem>>, %arg9: memref<16x128xf32, #tpu.memory_space<vmem>>, %arg10: memref<16x128xf32, #tpu.memory_space<vmem>>) attributes {dimension_semantics = [], scalar_prefetch = 0 : i64, scratch_operands = 0 : i64, tpu.core_type = #tpu.core_type<tc>} {
    %c0 = arith.constant 0 : index
    %c0_0 = arith.constant 0 : index
    %0 = memref.load %arg0[%c0, %c0_0] : memref<1x2xf32, #tpu.memory_space<smem>>
    %c0_1 = arith.constant 0 : index
    %c1 = arith.constant 1 : index
    %1 = memref.load %arg0[%c0_1, %c1] : memref<1x2xf32, #tpu.memory_space<smem>>
    %c0_2 = arith.constant 0 : index
    %c0_3 = arith.constant 0 : index
    %2 = vector.load %arg1[%c0_2, %c0_3] : memref<1x16xf32, #tpu.memory_space<vmem>>, vector<1x16xf32>
    %3 = vector.broadcast %0 : f32 to vector<1x16xf32>
    %4 = math.powf %2, %3 : vector<1x16xf32>
    %cst = arith.constant 9.99999993E-9 : f32
    %5 = vector.broadcast %cst : f32 to vector<1x16xf32>
    %6 = arith.subf %2, %5 : vector<1x16xf32>
    %cst_4 = arith.constant 2.000000e+00 : f32
    %7 = vector.broadcast %cst_4 : f32 to vector<1x16xf32>
    %8 = arith.mulf %7, %6 : vector<1x16xf32>
    %cst_5 = arith.constant 1.000000e+00 : f32
    %9 = vector.broadcast %cst_5 : f32 to vector<1x16xf32>
    %10 = arith.subf %8, %9 : vector<1x16xf32>
    %11 = arith.mulf %10, %10 : vector<1x16xf32>
    %cst_6 = arith.constant 1.000000e+00 : f32
    %12 = vector.broadcast %cst_6 : f32 to vector<1x16xf32>
    %13 = arith.addf %11, %12 : vector<1x16xf32>
    %14 = vector.broadcast %1 : f32 to vector<1x16xf32>
    %15 = math.powf %13, %14 : vector<1x16xf32>
    %c0_7 = arith.constant 0 : index
    %c0_8 = arith.constant 0 : index
    %16 = vector.load %arg3[%c0_7, %c0_8] : memref<16x16xf32, #tpu.memory_space<vmem>>, vector<16x16xf32>
    %c0_9 = arith.constant 0 : index
    %c0_10 = arith.constant 0 : index
    %17 = vector.load %arg4[%c0_9, %c0_10] : memref<16x16xf32, #tpu.memory_space<vmem>>, vector<16x16xf32>
    %c0_11 = arith.constant 0 : index
    %c0_12 = arith.constant 0 : index
    %18 = vector.load %arg2[%c0_11, %c0_12] : memref<16x128xf32, #tpu.memory_space<vmem>>, vector<16x128xf32>
    %cst_13 = arith.constant dense<0.000000e+00> : vector<16x128xf32>
    %19 = tpu.matmul %17, %18, %cst_13 {dimension_numbers = #tpu.dot_dimension_numbers<[1], [0], [0], [1], [0, 0, 1, 1], [], []>} : vector<16x16xf32>, vector<16x128xf32>, vector<16x128xf32> -> vector<16x128xf32>
    %20 = vector.broadcast %4 : vector<1x16xf32> to vector<16x16xf32>
    %21 = arith.mulf %16, %20 : vector<16x16xf32>
    %cst_14 = arith.constant dense<0.000000e+00> : vector<16x128xf32>
    %22 = tpu.matmul %21, %19, %cst_14 {dimension_numbers = #tpu.dot_dimension_numbers<[1], [0], [0], [1], [0, 0, 1, 1], [], []>} : vector<16x16xf32>, vector<16x128xf32>, vector<16x128xf32> -> vector<16x128xf32>
    %cst_15 = arith.constant dense<0.000000e+00> : vector<16x128xf32>
    %23 = tpu.matmul %17, %22, %cst_15 {dimension_numbers = #tpu.dot_dimension_numbers<[1], [0], [0], [1], [0, 0, 1, 1], [], []>} : vector<16x16xf32>, vector<16x128xf32>, vector<16x128xf32> -> vector<16x128xf32>
    %24 = vector.broadcast %15 : vector<1x16xf32> to vector<16x16xf32>
    %25 = arith.mulf %16, %24 : vector<16x16xf32>
    %cst_16 = arith.constant dense<0.000000e+00> : vector<16x128xf32>
    %26 = tpu.matmul %25, %23, %cst_16 {dimension_numbers = #tpu.dot_dimension_numbers<[1], [0], [0], [1], [0, 0, 1, 1], [], []>} : vector<16x16xf32>, vector<16x128xf32>, vector<16x128xf32> -> vector<16x128xf32>
    %c0_17 = arith.constant 0 : index
    %c0_18 = arith.constant 0 : index
    %27 = vector.load %arg5[%c0_17, %c0_18] : memref<128x128xf32, #tpu.memory_space<vmem>>, vector<128x128xf32>
    %cst_19 = arith.constant dense<0.000000e+00> : vector<16x128xf32>
    %28 = tpu.matmul %26, %27, %cst_19 {dimension_numbers = #tpu.dot_dimension_numbers<[1], [0], [0], [1], [0, 0, 1, 1], [], []>} : vector<16x128xf32>, vector<128x128xf32>, vector<16x128xf32> -> vector<16x128xf32>
    %c0_20 = arith.constant 0 : index
    %c0_21 = arith.constant 0 : index
    %29 = vector.load %arg6[%c0_20, %c0_21] : memref<1x128xf32, #tpu.memory_space<vmem>>, vector<1x128xf32>
    %30 = vector.broadcast %29 : vector<1x128xf32> to vector<16x128xf32>
    %31 = arith.addf %28, %30 : vector<16x128xf32>
    %cst_22 = arith.constant 0.000000e+00 : f32
    %32 = vector.broadcast %cst_22 : f32 to vector<16x128xf32>
    %33 = arith.maximumf %31, %32 : vector<16x128xf32>
    %c0_23 = arith.constant 0 : index
    %c0_24 = arith.constant 0 : index
    %34 = vector.load %arg10[%c0_23, %c0_24] : memref<16x128xf32, #tpu.memory_space<vmem>>, vector<16x128xf32>
    tpu.vector_store %arg10[%c0_23, %c0_24], %33 {strides = array<i32>} : memref<16x128xf32, #tpu.memory_space<vmem>>, vector<16x128xf32>,
    %c0_25 = arith.constant 0 : index
    %c0_26 = arith.constant 0 : index
    %35 = vector.load %arg7[%c0_25, %c0_26] : memref<128x128xf32, #tpu.memory_space<vmem>>, vector<128x128xf32>
    %cst_27 = arith.constant dense<0.000000e+00> : vector<16x128xf32>
    %36 = tpu.matmul %33, %35, %cst_27 {dimension_numbers = #tpu.dot_dimension_numbers<[1], [0], [0], [1], [0, 0, 1, 1], [], []>} : vector<16x128xf32>, vector<128x128xf32>, vector<16x128xf32> -> vector<16x128xf32>
    %c0_28 = arith.constant 0 : index
    %c0_29 = arith.constant 0 : index
    %37 = vector.load %arg8[%c0_28, %c0_29] : memref<1x128xf32, #tpu.memory_space<vmem>>, vector<1x128xf32>
    %38 = vector.broadcast %37 : vector<1x128xf32> to vector<16x128xf32>
    %39 = arith.addf %36, %38 : vector<16x128xf32>
    %cst_30 = arith.constant dense<0xFF800000> : vector<16xf32>
    %40 = vector.multi_reduction <maximumf>, %39, %cst_30 [1] : vector<16x128xf32> to vector<16xf32>
    %41 = vector.shape_cast %40 : vector<16xf32> to vector<16x1xf32>
    %42 = vector.broadcast %41 : vector<16x1xf32> to vector<16x128xf32>
    %43 = arith.subf %39, %42 : vector<16x128xf32>
    %44 = math.exp %43 : vector<16x128xf32>
    %cst_31 = arith.constant dense<0.000000e+00> : vector<16xf32>
    %45 = vector.multi_reduction <add>, %44, %cst_31 [1] : vector<16x128xf32> to vector<16xf32>
    %46 = vector.shape_cast %45 : vector<16xf32> to vector<16x1xf32>
    %47 = math.log %46 : vector<16x1xf32>
    %48 = vector.broadcast %47 : vector<16x1xf32> to vector<16x128xf32>
    %49 = arith.subf %43, %48 : vector<16x128xf32>
    %c0_32 = arith.constant 0 : index
    %c0_33 = arith.constant 0 : index
    %50 = vector.load %arg9[%c0_32, %c0_33] : memref<16x128xf32, #tpu.memory_space<vmem>>, vector<16x128xf32>
    tpu.vector_store %arg9[%c0_32, %c0_33], %49 {strides = array<i32>} : memref<16x128xf32, #tpu.memory_space<vmem>>, vector<16x128xf32>,
    return
  }
}

</mosaic_0001>

<llo_original>
// kernel: tpu_custom_call.1
$region0: #{tpu_custom_call.1}
  #allocation0 [shape = 'u32[]', space=smem, size = 0x4, offset = 0x4, fixed_abs, tag = 'smem constant byte address 0x4 - core index']
  #allocation1 [shape = 'u32[144,128]{1,0:T(1,128)}', space=vmem, size = 0x12000, scoped, tag = 'internal scratch']
  %s0 = inlined_call_operand.hbm [shape: f32[1,2], index: 0, kind: input, shape index: {}]
  %s1 = inlined_call_operand.vmem [shape: f32[1,16], index: 1, kind: input, shape index: {}]
  %s2 = inlined_call_operand.hbm [shape: f32[16,128], index: 2, kind: input, shape index: {}]
  %s3 = inlined_call_operand.hbm [shape: f32[16,16], index: 3, kind: input, shape index: {}]
  %s4 = inlined_call_operand.hbm [shape: f32[16,16], index: 4, kind: input, shape index: {}]
  %s5 = inlined_call_operand.hbm [shape: f32[128,128], index: 5, kind: input, shape index: {}]
  %s6 = inlined_call_operand.vmem [shape: f32[1,128], index: 6, kind: input, shape index: {}]
  %s7 = inlined_call_operand.hbm [shape: f32[128,128], index: 7, kind: input, shape index: {}]
  %s8 = inlined_call_operand.vmem [shape: f32[1,128], index: 8, kind: input, shape index: {}]
  %s9 = inlined_call_operand.hbm [shape: f32[16,128], index: 9, kind: output, shape index: {0}]
  %s10 = inlined_call_operand.hbm [shape: f32[16,128], index: 10, kind: output, shape index: {1}]
  %11 = xla_tuple %s9, %s10
  %s12 = sld [smem:[#allocation0]]
  $region78: #{tpu_custom_call.1} parent=0
    _
  %s14 = ssub.s32 1, %s12
  %s15 = scalar_select 0, %s14, %s12
  $region1: #{tpu_custom_call.1} parent=0
    #allocation2 [shape = 'u8[512]{0}', space=smem, size = 0x200, scoped, tag = 'input window, operand 0, single buffered']
    #allocation3 [shape = 's32[1]{0}', space=sflag, size = 0x4, scoped, tag = 'scoped memory for tpu_custom_call.1']
    #allocation4 [shape = 's32[1]{0}', space=sflag, size = 0x4, scoped, tag = 'scoped memory for tpu_custom_call.1']
    #allocation5 [shape = 's32[1]{0}', space=sflag, size = 0x4, scoped, tag = 'scoped memory for tpu_custom_call.1']
    #allocation6 [shape = 'u8[8192]{0}', space=vmem, size = 0x2000, scoped, tag = 'input window, operand 2, single buffered']
    #allocation7 [shape = 'u8[8192]{0}', space=vmem, size = 0x2000, scoped, tag = 'input window, operand 3, single buffered']
    #allocation8 [shape = 's32[1]{0}', space=sflag, size = 0x4, scoped, tag = 'scoped memory for tpu_custom_call.1']
    #allocation9 [shape = 'u8[8192]{0}', space=vmem, size = 0x2000, scoped, tag = 'input window, operand 4, single buffered']
    #allocation10 [shape = 'u8[65536]{0}', space=vmem, size = 0x10000, scoped, tag = 'input window, operand 5, single buffered']
    #allocation11 [shape = 's32[1]{0}', space=sflag, size = 0x4, scoped, tag = 'scoped memory for tpu_custom_call.1']
    #allocation12 [shape = 'u8[65536]{0}', space=vmem, size = 0x10000, scoped, tag = 'input window, operand 7, single buffered']
    #allocation13 [shape = 'u8[8192]{0}', space=vmem, size = 0x2000, scoped, tag = 'output window, operand 0, single buffered']
    #allocation14 [shape = 'u8[8192]{0}', space=vmem, size = 0x2000, scoped, tag = 'output window, operand 1, single buffered']
    #allocation15 [shape = 's32[1]{0}', space=sflag, size = 0x4, scoped, tag = 'scoped memory for tpu_custom_call.1']
    %16 = vsyncpa [#allocation5], 0
    %17 = vsyncpa [#allocation3], 0
    %18 = vsyncpa [#allocation8], 0
    %19 = vsyncpa [#allocation11], 0
    %20 = vsyncpa [#allocation4], 0
    %21 = vsyncpa [#allocation15], 0
    // Predicated region
    $region2: #{tpu_custom_call.1} parent=1 // pred_check
      _
    $region3: #{tpu_custom_call.1} parent=1 // pred_check_branch
      %23 = sbr.rel (0) target = $region5
    $region4: #{tpu_custom_call.1} parent=1 // pred_region
      %s25 = ssub.s32 16, 16
      %26 = vsyncadd [#allocation5], %s25
      %29 = dma.hbm_to_smem %s0, 16, [#allocation2], [#allocation5]
    $region5: #{tpu_custom_call.1} parent=1 // pred_fallthru
      _
    // Predicated region
    $region6: #{tpu_custom_call.1} parent=1 // pred_check
      _
    $region7: #{tpu_custom_call.1} parent=1 // pred_check_branch
      %31 = sbr.rel (0) target = $region9
    $region8: #{tpu_custom_call.1} parent=1 // pred_region
      _
    $region9: #{tpu_custom_call.1} parent=1 // pred_fallthru
      _
    // Predicated region
    $region10: #{tpu_custom_call.1} parent=1 // pred_check
      _
    $region11: #{tpu_custom_call.1} parent=1 // pred_check_branch
      %33 = sbr.rel (0) target = $region13
    $region12: #{tpu_custom_call.1} parent=1 // pred_region
      %s35 = ssub.s32 256, 256
      %36 = vsyncadd [#allocation3], %s35
      %s37 = sshll.u32 [#allocation6], 4
      %s38 = int_to_ptr.vmem [resolvable:$true] %s37
      %43 = dma.hbm_to_vmem [thread:$0]  %s2, 256, %s38, [#allocation3], 128, 128, 8
    $region13: #{tpu_custom_call.1} parent=1 // pred_fallthru
      _
    // Predicated region
    $region14: #{tpu_custom_call.1} parent=1 // pred_check
      _
    $region15: #{tpu_custom_call.1} parent=1 // pred_check_branch
      %45 = sbr.rel (0) target = $region17
    $region16: #{tpu_custom_call.1} parent=1 // pred_region
      %s47 = ssub.s32 256, 256
      %48 = vsyncadd [#allocation8], %s47
      %s49 = sshll.u32 [#allocation7], 4
      %s50 = int_to_ptr.vmem [resolvable:$true] %s49
      %55 = dma.hbm_to_vmem [thread:$0]  %s3, 256, %s50, [#allocation8], 128, 128, 8
    $region17: #{tpu_custom_call.1} parent=1 // pred_fallthru
      _
    // Predicated region
    $region18: #{tpu_custom_call.1} parent=1 // pred_check
      _
    $region19: #{tpu_custom_call.1} parent=1 // pred_check_branch
      %57 = sbr.rel (0) target = $region21
    $region20: #{tpu_custom_call.1} parent=1 // pred_region
      %s59 = ssub.s32 256, 256
      %60 = vsyncadd [#allocation8], %s59
      %s61 = sshll.u32 [#allocation9], 4
      %s62 = int_to_ptr.vmem [resolvable:$true] %s61
      %67 = dma.hbm_to_vmem [thread:$0]  %s4, 256, %s62, [#allocation8], 128, 128, 8
    $region21: #{tpu_custom_call.1} parent=1 // pred_fallthru
      _
    // Predicated region
    $region22: #{tpu_custom_call.1} parent=1 // pred_check
      _
    $region23: #{tpu_custom_call.1} parent=1 // pred_check_branch
      %69 = sbr.rel (0) target = $region25
    $region24: #{tpu_custom_call.1} parent=1 // pred_region
      %s71 = ssub.s32 2048, 2048
      %72 = vsyncadd [#allocation11], %s71
      %s73 = sshll.u32 [#allocation10], 4
      %s74 = int_to_ptr.vmem [resolvable:$true] %s73
      %79 = dma.hbm_to_vmem [thread:$0]  %s5, 2048, %s74, [#allocation11], 128, 128, 8
    $region25: #{tpu_custom_call.1} parent=1 // pred_fallthru
      _
    // Predicated region
    $region26: #{tpu_custom_call.1} parent=1 // pred_check
      _
    $region27: #{tpu_custom_call.1} parent=1 // pred_check_branch
      %81 = sbr.rel (0) target = $region29
    $region28: #{tpu_custom_call.1} parent=1 // pred_region
      _
    $region29: #{tpu_custom_call.1} parent=1 // pred_fallthru
      _
    // Predicated region
    $region30: #{tpu_custom_call.1} parent=1 // pred_check
      _
    $region31: #{tpu_custom_call.1} parent=1 // pred_check_branch
      %83 = sbr.rel (0) target = $region33
    $region32: #{tpu_custom_call.1} parent=1 // pred_region
      %s85 = ssub.s32 2048, 2048
      %86 = vsyncadd [#allocation11], %s85
      %s87 = sshll.u32 [#allocation12], 4
      %s88 = int_to_ptr.vmem [resolvable:$true] %s87
      %93 = dma.hbm_to_vmem [thread:$0]  %s7, 2048, %s88, [#allocation11], 128, 128, 8
    $region33: #{tpu_custom_call.1} parent=1 // pred_fallthru
      _
    // Predicated region
    $region34: #{tpu_custom_call.1} parent=1 // pred_check
      _
    $region35: #{tpu_custom_call.1} parent=1 // pred_check_branch
      %95 = sbr.rel (0) target = $region37
    $region36: #{tpu_custom_call.1} parent=1 // pred_region
      _
    $region37: #{tpu_custom_call.1} parent=1 // pred_fallthru
      _
    // Predicated region
    $region38: #{tpu_custom_call.1} parent=1 // pred_check
      _
    $region39: #{tpu_custom_call.1} parent=1 // pred_check_branch
      %97 = sbr.rel (0) target = $region41
    $region40: #{tpu_custom_call.1} parent=1 // pred_region
      %98 = dma.done [#allocation5], 16
    $region41: #{tpu_custom_call.1} parent=1 // pred_fallthru
      _
    // Predicated region
    $region42: #{tpu_custom_call.1} parent=1 // pred_check
      _
    $region43: #{tpu_custom_call.1} parent=1 // pred_check_branch
      %100 = sbr.rel (0) target = $region45
    $region44: #{tpu_custom_call.1} parent=1 // pred_region
      %101 = dma.done [#allocation3], 256
    $region45: #{tpu_custom_call.1} parent=1 // pred_fallthru
      _
    // Predicated region
    $region46: #{tpu_custom_call.1} parent=1 // pred_check
      _
    $region47: #{tpu_custom_call.1} parent=1 // pred_check_branch
      %103 = sbr.rel (0) target = $region49
    $region48: #{tpu_custom_call.1} parent=1 // pred_region
      %104 = dma.done [#allocation8], 256
    $region49: #{tpu_custom_call.1} parent=1 // pred_fallthru
      _
    // Predicated region
    $region50: #{tpu_custom_call.1} parent=1 // pred_check
      _
    $region51: #{tpu_custom_call.1} parent=1 // pred_check_branch
      %106 = sbr.rel (0) target = $region53
    $region52: #{tpu_custom_call.1} parent=1 // pred_region
      %107 = dma.done [#allocation8], 256
    $region53: #{tpu_custom_call.1} parent=1 // pred_fallthru
      _
    // Predicated region
    $region54: #{tpu_custom_call.1} parent=1 // pred_check
      _
    $region55: #{tpu_custom_call.1} parent=1 // pred_check_branch
      %109 = sbr.rel (0) target = $region57
    $region56: #{tpu_custom_call.1} parent=1 // pred_region
      %110 = dma.done [#allocation11], 2048
    $region57: #{tpu_custom_call.1} parent=1 // pred_fallthru
      _
    // Predicated region
    $region58: #{tpu_custom_call.1} parent=1 // pred_check
      _
    $region59: #{tpu_custom_call.1} parent=1 // pred_check_branch
      %112 = sbr.rel (0) target = $region61
    $region60: #{tpu_custom_call.1} parent=1 // pred_region
      %113 = dma.done [#allocation11], 2048
    $region61: #{tpu_custom_call.1} parent=1 // pred_fallthru
      _
    %114 = sfence
    %s115 = sld [smem:[#allocation2]]
    %s116 = sld [smem:[#allocation2 + $0x1]]
    %v117 = vld [vmem:[%s1] sm:$0x1]
    %v118 = vstv %s115
    %v119 = vpow.f32 %v117, %v118
    %v120 = vsub.f32 %v117, 1e-08
    %v121 = vmul.f32 %v120, 2.0
    %v122 = vsub.f32 %v121, 1.0
    %v123 = vmul.f32 %v122, %v122
    %v124 = vadd.f32 %v123, 1.0
    %v125 = vstv %s116
    %v126 = vpow.f32 %v124, %v125
    %v127 = vld [vmem:[#allocation7] sm:$0xff]
    %v128 = vld [vmem:[#allocation7 + $0x8] sm:$0xff]
    %v129 = vld [vmem:[#allocation9] sm:$0xff]
    %v130 = vld [vmem:[#allocation9 + $0x8] sm:$0xff]
    %v131 = vld [vmem:[#allocation6] sm:$0xff]
    %v132 = vld [vmem:[#allocation6 + $0x8] sm:$0xff]
    %vm133 = vcmask 130048
    %v135 = vsel %vm133, %v129, 0
    %v138 = vsel %vm133, %v130, 0
    %140 = vmatprep.subr.mxu0 0.0
    %141 = vmatpush1.msra.mxu0 0.0
    %142 = vmatprep.subr.mxu0 0.0
    %143 = vmatpush1.msra.mxu0 0.0
    %144 = vmatprep.subr.mxu0 0.0
    %145 = vmatpush1.msra.mxu0 0.0
    %146 = vmatprep.subr.mxu0 0.0
    %147 = vmatpush1.msra.mxu0 0.0
    %148 = vmatprep.subr.mxu0 0.0
    %149 = vmatpush1.msra.mxu0 0.0
    %150 = vmatprep.subr.mxu0 0.0
    %151 = vmatpush1.msra.mxu0 0.0
    %152 = vmatprep.subr.mxu0 0.0
    %153 = vmatpush1.msra.mxu0 0.0
    %154 = vmatprep.subr.mxu0 0.0
    %155 = vmatpush1.msra.mxu0 0.0
    %156 = vmatprep.subr.mxu0 0.0
    %157 = vmatpush1.msra.mxu0 0.0
    %158 = vmatprep.subr.mxu0 0.0
    %159 = vmatpush1.msra.mxu0 0.0
    %160 = vmatprep.subr.mxu0 0.0
    %161 = vmatpush1.msra.mxu0 0.0
    %162 = vmatprep.subr.mxu0 0.0
    %163 = vmatpush1.msra.mxu0 0.0
    %164 = vmatprep.subr.mxu0 0.0
    %165 = vmatpush1.msra.mxu0 0.0
    %166 = vmatprep.subr.mxu0 0.0
    %167 = vmatpush1.msra.mxu0 0.0
    %168 = vmatprep.subr.mxu0 0.0
    %169 = vmatpush1.msra.mxu0 %v132
    %170 = vmatprep.subr.mxu0 0.0
    %171 = vmatpush1.msra.mxu0 %v131
    %172 = vmatprep.subr.mxu0 0.0
    %173 = vmatpush2.msra.mxu0 0.0
    %174 = vmatprep.subr.mxu0 0.0
    %175 = vmatpush2.msra.mxu0 0.0
    %176 = vmatprep.subr.mxu0 0.0
    %177 = vmatpush2.msra.mxu0 0.0
    %178 = vmatprep.subr.mxu0 0.0
    %179 = vmatpush2.msra.mxu0 0.0
    %180 = vmatprep.subr.mxu0 0.0
    %181 = vmatpush2.msra.mxu0 0.0
    %182 = vmatprep.subr.mxu0 0.0
    %183 = vmatpush2.msra.mxu0 0.0
    %184 = vmatprep.subr.mxu0 0.0
    %185 = vmatpush2.msra.mxu0 0.0
    %186 = vmatprep.subr.mxu0 0.0
    %187 = vmatpush2.msra.mxu0 0.0
    %188 = vmatprep.subr.mxu0 0.0
    %189 = vmatpush2.msra.mxu0 0.0
    %190 = vmatprep.subr.mxu0 0.0
    %191 = vmatpush2.msra.mxu0 0.0
    %192 = vmatprep.subr.mxu0 0.0
    %193 = vmatpush2.msra.mxu0 0.0
    %194 = vmatprep.subr.mxu0 0.0
    %195 = vmatpush2.msra.mxu0 0.0
    %196 = vmatprep.subr.mxu0 0.0
    %197 = vmatpush2.msra.mxu0 0.0
    %198 = vmatprep.subr.mxu0 0.0
    %199 = vmatpush2.msra.mxu0 0.0
    %200 = vmatprep.subr.mxu0 0.0
    %201 = vmatpush2.msra.mxu0 0.0
    %202 = vmatprep.subr.mxu0 0.0
    %203 = vmatpush2.msra.mxu0 0.0
    %204 = vmatprep.mubr.f32.mxu0 0.0
    %205 = vmatmul.mubr.f32.gmra.mxu0 %v135
    %v206 = vpop.f32.mrf.mxu0
    %v207 = vadd.f32 0.0, %v206
    %v208 = vpop.f32.mrf.mxu0
    %209 = vmatprep.mubr.f32.mxu0 0.0
    %210 = vmatmul.mubr.f32.gmra.mxu0 %v138
    %v211 = vpop.f32.mrf.mxu0
    %v212 = vadd.f32 0.0, %v211
    %v213 = vpop.f32.mrf.mxu0
    %214 = vdwg.mxu0
    %v216 = vlaneseq
    %v217 = vshrl.u32 %v216, 7
    %v218 = vsub.s32 0, %v217
    %v219 = vrot.slane %v119, %v218
    %v221 = vmul.f32 %v127, %v219
    %v222 = vmul.f32 %v128, %v219
    %v224 = vsel %vm133, %v221, 0
    %v227 = vsel %vm133, %v222, 0
    %229 = vmatprep.subr.mxu0 0.0
    %230 = vmatpush1.msra.mxu0 0.0
    %231 = vmatprep.subr.mxu0 0.0
    %232 = vmatpush1.msra.mxu0 0.0
    %233 = vmatprep.subr.mxu0 0.0
    %234 = vmatpush1.msra.mxu0 0.0
    %235 = vmatprep.subr.mxu0 0.0
    %236 = vmatpush1.msra.mxu0 0.0
    %237 = vmatprep.subr.mxu0 0.0
    %238 = vmatpush1.msra.mxu0 0.0
    %239 = vmatprep.subr.mxu0 0.0
    %240 = vmatpush1.msra.mxu0 0.0
    %241 = vmatprep.subr.mxu0 0.0
    %242 = vmatpush1.msra.mxu0 0.0
    %243 = vmatprep.subr.mxu0 0.0
    %244 = vmatpush1.msra.mxu0 0.0
    %245 = vmatprep.subr.mxu0 0.0
    %246 = vmatpush1.msra.mxu0 0.0
    %247 = vmatprep.subr.mxu0 0.0
    %248 = vmatpush1.msra.mxu0 0.0
    %249 = vmatprep.subr.mxu0 0.0
    %250 = vmatpush1.msra.mxu0 0.0
    %251 = vmatprep.subr.mxu0 0.0
    %252 = vmatpush1.msra.mxu0 0.0
    %253 = vmatprep.subr.mxu0 0.0
    %254 = vmatpush1.msra.mxu0 0.0
    %255 = vmatprep.subr.mxu0 0.0
    %256 = vmatpush1.msra.mxu0 0.0
    %257 = vmatprep.subr.mxu0 0.0
    %258 = vmatpush1.msra.mxu0 %v212
    %259 = vmatprep.subr.mxu0 0.0
    %260 = vmatpush1.msra.mxu0 %v207
    %261 = vmatprep.subr.mxu0 0.0
    %262 = vmatpush2.msra.mxu0 0.0
    %263 = vmatprep.subr.mxu0 0.0
    %264 = vmatpush2.msra.mxu0 0.0
    %265 = vmatprep.subr.mxu0 0.0
    %266 = vmatpush2.msra.mxu0 0.0
    %267 = vmatprep.subr.mxu0 0.0
    %268 = vmatpush2.msra.mxu0 0.0
    %269 = vmatprep.subr.mxu0 0.0
    %270 = vmatpush2.msra.mxu0 0.0
    %271 = vmatprep.subr.mxu0 0.0
    %272 = vmatpush2.msra.mxu0 0.0
    %273 = vmatprep.subr.mxu0 0.0
    %274 = vmatpush2.msra.mxu0 0.0
    %275 = vmatprep.subr.mxu0 0.0
    %276 = vmatpush2.msra.mxu0 0.0
    %277 = vmatprep.subr.mxu0 0.0
    %278 = vmatpush2.msra.mxu0 0.0
    %279 = vmatprep.subr.mxu0 0.0
    %280 = vmatpush2.msra.mxu0 0.0
    %281 = vmatprep.subr.mxu0 0.0
    %282 = vmatpush2.msra.mxu0 0.0
    %283 = vmatprep.subr.mxu0 0.0
    %284 = vmatpush2.msra.mxu0 0.0
    %285 = vmatprep.subr.mxu0 0.0
    %286 = vmatpush2.msra.mxu0 0.0
    %287 = vmatprep.subr.mxu0 0.0
    %288 = vmatpush2.msra.mxu0 0.0
    %289 = vmatprep.subr.mxu0 0.0
    %290 = vmatpush2.msra.mxu0 0.0
    %291 = vmatprep.subr.mxu0 0.0
    %292 = vmatpush2.msra.mxu0 0.0
    %293 = vmatprep.mubr.f32.mxu0 0.0
    %294 = vmatmul.mubr.f32.gmra.mxu0 %v224
    %v295 = vpop.f32.mrf.mxu0
    %v296 = vadd.f32 0.0, %v295
    %v297 = vpop.f32.mrf.mxu0
    %298 = vmatprep.mubr.f32.mxu0 0.0
    %299 = vmatmul.mubr.f32.gmra.mxu0 %v227
    %v300 = vpop.f32.mrf.mxu0
    %v301 = vadd.f32 0.0, %v300
    %v302 = vpop.f32.mrf.mxu0
    %303 = vdwg.mxu0
    %304 = vmatprep.subr.mxu0 0.0
    %305 = vmatpush1.msra.mxu0 0.0
    %306 = vmatprep.subr.mxu0 0.0
    %307 = vmatpush1.msra.mxu0 0.0
    %308 = vmatprep.subr.mxu0 0.0
    %309 = vmatpush1.msra.mxu0 0.0
    %310 = vmatprep.subr.mxu0 0.0
    %311 = vmatpush1.msra.mxu0 0.0
    %312 = vmatprep.subr.mxu0 0.0
    %313 = vmatpush1.msra.mxu0 0.0
    %314 = vmatprep.subr.mxu0 0.0
    %315 = vmatpush1.msra.mxu0 0.0
    %316 = vmatprep.subr.mxu0 0.0
    %317 = vmatpush1.msra.mxu0 0.0
    %318 = vmatprep.subr.mxu0 0.0
    %319 = vmatpush1.msra.mxu0 0.0
    %320 = vmatprep.subr.mxu0 0.0
    %321 = vmatpush1.msra.mxu0 0.0
    %322 = vmatprep.subr.mxu0 0.0
    %323 = vmatpush1.msra.mxu0 0.0
    %324 = vmatprep.subr.mxu0 0.0
    %325 = vmatpush1.msra.mxu0 0.0
    %326 = vmatprep.subr.mxu0 0.0
    %327 = vmatpush1.msra.mxu0 0.0
    %328 = vmatprep.subr.mxu0 0.0
    %329 = vmatpush1.msra.mxu0 0.0
    %330 = vmatprep.subr.mxu0 0.0
    %331 = vmatpush1.msra.mxu0 0.0
    %332 = vmatprep.subr.mxu0 0.0
    %333 = vmatpush1.msra.mxu0 %v301
    %334 = vmatprep.subr.mxu0 0.0
    %335 = vmatpush1.msra.mxu0 %v296
    %336 = vmatprep.subr.mxu0 0.0
    %337 = vmatpush2.msra.mxu0 0.0
    %338 = vmatprep.subr.mxu0 0.0
    %339 = vmatpush2.msra.mxu0 0.0
    %340 = vmatprep.subr.mxu0 0.0
    %341 = vmatpush2.msra.mxu0 0.0
    %342 = vmatprep.subr.mxu0 0.0
    %343 = vmatpush2.msra.mxu0 0.0
    %344 = vmatprep.subr.mxu0 0.0
    %345 = vmatpush2.msra.mxu0 0.0
    %346 = vmatprep.subr.mxu0 0.0
    %347 = vmatpush2.msra.mxu0 0.0
    %348 = vmatprep.subr.mxu0 0.0
    %349 = vmatpush2.msra.mxu0 0.0
    %350 = vmatprep.subr.mxu0 0.0
    %351 = vmatpush2.msra.mxu0 0.0
    %352 = vmatprep.subr.mxu0 0.0
    %353 = vmatpush2.msra.mxu0 0.0
    %354 = vmatprep.subr.mxu0 0.0
    %355 = vmatpush2.msra.mxu0 0.0
    %356 = vmatprep.subr.mxu0 0.0
    %357 = vmatpush2.msra.mxu0 0.0
    %358 = vmatprep.subr.mxu0 0.0
    %359 = vmatpush2.msra.mxu0 0.0
    %360 = vmatprep.subr.mxu0 0.0
    %361 = vmatpush2.msra.mxu0 0.0
    %362 = vmatprep.subr.mxu0 0.0
    %363 = vmatpush2.msra.mxu0 0.0
    %364 = vmatprep.subr.mxu0 0.0
    %365 = vmatpush2.msra.mxu0 0.0
    %366 = vmatprep.subr.mxu0 0.0
    %367 = vmatpush2.msra.mxu0 0.0
    %368 = vmatprep.mubr.f32.mxu0 0.0
    %369 = vmatmul.mubr.f32.gmra.mxu0 %v135
    %v370 = vpop.f32.mrf.mxu0
    %v371 = vadd.f32 0.0, %v370
    %v372 = vpop.f32.mrf.mxu0
    %373 = vmatprep.mubr.f32.mxu0 0.0
    %374 = vmatmul.mubr.f32.gmra.mxu0 %v138
    %v375 = vpop.f32.mrf.mxu0
    %v376 = vadd.f32 0.0, %v375
    %v377 = vpop.f32.mrf.mxu0
    %378 = vdwg.mxu0
    %v380 = vlaneseq
    %v381 = vshrl.u32 %v380, 7
    %v382 = vsub.s32 0, %v381
    %v383 = vrot.slane %v126, %v382
    %v385 = vmul.f32 %v127, %v383
    %v386 = vmul.f32 %v128, %v383
    %v388 = vsel %vm133, %v385, 0
    %v391 = vsel %vm133, %v386, 0
    %393 = vmatprep.subr.mxu0 0.0
    %394 = vmatpush1.msra.mxu0 0.0
    %395 = vmatprep.subr.mxu0 0.0
    %396 = vmatpush1.msra.mxu0 0.0
    %397 = vmatprep.subr.mxu0 0.0
    %398 = vmatpush1.msra.mxu0 0.0
    %399 = vmatprep.subr.mxu0 0.0
    %400 = vmatpush1.msra.mxu0 0.0
    %401 = vmatprep.subr.mxu0 0.0
    %402 = vmatpush1.msra.mxu0 0.0
    %403 = vmatprep.subr.mxu0 0.0
    %404 = vmatpush1.msra.mxu0 0.0
    %405 = vmatprep.subr.mxu0 0.0
    %406 = vmatpush1.msra.mxu0 0.0
    %407 = vmatprep.subr.mxu0 0.0
    %408 = vmatpush1.msra.mxu0 0.0
    %409 = vmatprep.subr.mxu0 0.0
    %410 = vmatpush1.msra.mxu0 0.0
    %411 = vmatprep.subr.mxu0 0.0
    %412 = vmatpush1.msra.mxu0 0.0
    %413 = vmatprep.subr.mxu0 0.0
    %414 = vmatpush1.msra.mxu0 0.0
    %415 = vmatprep.subr.mxu0 0.0
    %416 = vmatpush1.msra.mxu0 0.0
    %417 = vmatprep.subr.mxu0 0.0
    %418 = vmatpush1.msra.mxu0 0.0
    %419 = vmatprep.subr.mxu0 0.0
    %420 = vmatpush1.msra.mxu0 0.0
    %421 = vmatprep.subr.mxu0 0.0
    %422 = vmatpush1.msra.mxu0 %v376
    %423 = vmatprep.subr.mxu0 0.0
    %424 = vmatpush1.msra.mxu0 %v371
    %425 = vmatprep.subr.mxu0 0.0
    %426 = vmatpush2.msra.mxu0 0.0
    %427 = vmatprep.subr.mxu0 0.0
    %428 = vmatpush2.msra.mxu0 0.0
    %429 = vmatprep.subr.mxu0 0.0
    %430 = vmatpush2.msra.mxu0 0.0
    %431 = vmatprep.subr.mxu0 0.0
    %432 = vmatpush2.msra.mxu0 0.0
    %433 = vmatprep.subr.mxu0 0.0
    %434 = vmatpush2.msra.mxu0 0.0
    %435 = vmatprep.subr.mxu0 0.0
    %436 = vmatpush2.msra.mxu0 0.0
    %437 = vmatprep.subr.mxu0 0.0
    %438 = vmatpush2.msra.mxu0 0.0
    %439 = vmatprep.subr.mxu0 0.0
    %440 = vmatpush2.msra.mxu0 0.0
    %441 = vmatprep.subr.mxu0 0.0
    %442 = vmatpush2.msra.mxu0 0.0
    %443 = vmatprep.subr.mxu0 0.0
    %444 = vmatpush2.msra.mxu0 0.0
    %445 = vmatprep.subr.mxu0 0.0
    %446 = vmatpush2.msra.mxu0 0.0
    %447 = vmatprep.subr.mxu0 0.0
    %448 = vmatpush2.msra.mxu0 0.0
    %449 = vmatprep.subr.mxu0 0.0
    %450 = vmatpush2.msra.mxu0 0.0
    %451 = vmatprep.subr.mxu0 0.0
    %452 = vmatpush2.msra.mxu0 0.0
    %453 = vmatprep.subr.mxu0 0.0
    %454 = vmatpush2.msra.mxu0 0.0
    %455 = vmatprep.subr.mxu0 0.0
    %456 = vmatpush2.msra.mxu0 0.0
    %457 = vmatprep.mubr.f32.mxu0 0.0
    %458 = vmatmul.mubr.f32.gmra.mxu0 %v388
    %v459 = vpop.f32.mrf.mxu0
    %v460 = vadd.f32 0.0, %v459
    %v461 = vpop.f32.mrf.mxu0
    %462 = vmatprep.mubr.f32.mxu0 0.0
    %463 = vmatmul.mubr.f32.gmra.mxu0 %v391
    %v464 = vpop.f32.mrf.mxu0
    %v465 = vadd.f32 0.0, %v464
    %v466 = vpop.f32.mrf.mxu0
    %467 = vdwg.mxu0
    %v468 = vld [vmem:[#allocation10] sm:$0xff]
    %v469 = vld [vmem:[#allocation10 + $0x8] sm:$0xff]
    %v470 = vld [vmem:[#allocation10 + $0x10] sm:$0xff]
    %v471 = vld [vmem:[#allocation10 + $0x18] sm:$0xff]
    %v472 = vld [vmem:[#allocation10 + $0x20] sm:$0xff]
    %v473 = vld [vmem:[#allocation10 + $0x28] sm:$0xff]
    %v474 = vld [vmem:[#allocation10 + $0x30] sm:$0xff]
    %v475 = vld [vmem:[#allocation10 + $0x38] sm:$0xff]
    %v476 = vld [vmem:[#allocation10 + $0x40] sm:$0xff]
    %v477 = vld [vmem:[#allocation10 + $0x48] sm:$0xff]
    %v478 = vld [vmem:[#allocation10 + $0x50] sm:$0xff]
    %v479 = vld [vmem:[#allocation10 + $0x58] sm:$0xff]
    %v480 = vld [vmem:[#allocation10 + $0x60] sm:$0xff]
    %v481 = vld [vmem:[#allocation10 + $0x68] sm:$0xff]
    %v482 = vld [vmem:[#allocation10 + $0x70] sm:$0xff]
    %v483 = vld [vmem:[#allocation10 + $0x78] sm:$0xff]
    %v484 = vld [vmem:[%s6] sm:$0x1]
    %v486 = vlaneseq
    %v487 = vshrl.u32 %v486, 7
    %v488 = vsub.s32 0, %v487
    %v489 = vrot.slane %v484, %v488
    %491 = vmatprep.subr.mxu0 0.0
    %492 = vmatpush1.msra.mxu0 %v483
    %493 = vmatprep.subr.mxu0 0.0
    %494 = vmatpush1.msra.mxu0 %v482
    %495 = vmatprep.subr.mxu0 0.0
    %496 = vmatpush1.msra.mxu0 %v481
    %497 = vmatprep.subr.mxu0 0.0
    %498 = vmatpush1.msra.mxu0 %v480
    %499 = vmatprep.subr.mxu0 0.0
    %500 = vmatpush1.msra.mxu0 %v479
    %501 = vmatprep.subr.mxu0 0.0
    %502 = vmatpush1.msra.mxu0 %v478
    %503 = vmatprep.subr.mxu0 0.0
    %504 = vmatpush1.msra.mxu0 %v477
    %505 = vmatprep.subr.mxu0 0.0
    %506 = vmatpush1.msra.mxu0 %v476
    %507 = vmatprep.subr.mxu0 0.0
    %508 = vmatpush1.msra.mxu0 %v475
    %509 = vmatprep.subr.mxu0 0.0
    %510 = vmatpush1.msra.mxu0 %v474
    %511 = vmatprep.subr.mxu0 0.0
    %512 = vmatpush1.msra.mxu0 %v473
    %513 = vmatprep.subr.mxu0 0.0
    %514 = vmatpush1.msra.mxu0 %v472
    %515 = vmatprep.subr.mxu0 0.0
    %516 = vmatpush1.msra.mxu0 %v471
    %517 = vmatprep.subr.mxu0 0.0
    %518 = vmatpush1.msra.mxu0 %v470
    %519 = vmatprep.subr.mxu0 0.0
    %520 = vmatpush1.msra.mxu0 %v469
    %521 = vmatprep.subr.mxu0 0.0
    %522 = vmatpush1.msra.mxu0 %v468
    %523 = vmatprep.subr.mxu0 0.0
    %524 = vmatpush2.msra.mxu0 0.0
    %525 = vmatprep.subr.mxu0 0.0
    %526 = vmatpush2.msra.mxu0 0.0
    %527 = vmatprep.subr.mxu0 0.0
    %528 = vmatpush2.msra.mxu0 0.0
    %529 = vmatprep.subr.mxu0 0.0
    %530 = vmatpush2.msra.mxu0 0.0
    %531 = vmatprep.subr.mxu0 0.0
    %532 = vmatpush2.msra.mxu0 0.0
    %533 = vmatprep.subr.mxu0 0.0
    %534 = vmatpush2.msra.mxu0 0.0
    %535 = vmatprep.subr.mxu0 0.0
    %536 = vmatpush2.msra.mxu0 0.0
    %537 = vmatprep.subr.mxu0 0.0
    %538 = vmatpush2.msra.mxu0 0.0
    %539 = vmatprep.subr.mxu0 0.0
    %540 = vmatpush2.msra.mxu0 0.0
    %541 = vmatprep.subr.mxu0 0.0
    %542 = vmatpush2.msra.mxu0 0.0
    %543 = vmatprep.subr.mxu0 0.0
    %544 = vmatpush2.msra.mxu0 0.0
    %545 = vmatprep.subr.mxu0 0.0
    %546 = vmatpush2.msra.mxu0 0.0
    %547 = vmatprep.subr.mxu0 0.0
    %548 = vmatpush2.msra.mxu0 0.0
    %549 = vmatprep.subr.mxu0 0.0
    %550 = vmatpush2.msra.mxu0 0.0
    %551 = vmatprep.subr.mxu0 0.0
    %552 = vmatpush2.msra.mxu0 0.0
    %553 = vmatprep.subr.mxu0 0.0
    %554 = vmatpush2.msra.mxu0 0.0
    %555 = vmatprep.mubr.f32.mxu0 0.0
    %556 = vmatmul.mubr.f32.gmra.mxu0 %v460
    %v557 = vpop.f32.mrf.mxu0
    %v558 = vadd.f32 %v489, %v557
    %v559 = vpop.f32.mrf.mxu0
    %560 = vmatprep.mubr.f32.mxu0 0.0
    %561 = vmatmul.mubr.f32.gmra.mxu0 %v465
    %v562 = vpop.f32.mrf.mxu0
    %v563 = vadd.f32 %v489, %v562
    %v564 = vpop.f32.mrf.mxu0
    %565 = vdwg.mxu0
    %v566 = vmax.f32 %v558, 0.0
    %v567 = vmax.f32 %v563, 0.0
    %568 = vst [vmem:[#allocation14] sm:$0xff] %v566
    %569 = vst [vmem:[#allocation14 + $0x8] sm:$0xff] %v567
    %v570 = vld [vmem:[#allocation12] sm:$0xff]
    %v571 = vld [vmem:[#allocation12 + $0x8] sm:$0xff]
    %v572 = vld [vmem:[#allocation12 + $0x10] sm:$0xff]
    %v573 = vld [vmem:[#allocation12 + $0x18] sm:$0xff]
    %v574 = vld [vmem:[#allocation12 + $0x20] sm:$0xff]
    %v575 = vld [vmem:[#allocation12 + $0x28] sm:$0xff]
    %v576 = vld [vmem:[#allocation12 + $0x30] sm:$0xff]
    %v577 = vld [vmem:[#allocation12 + $0x38] sm:$0xff]
    %v578 = vld [vmem:[#allocation12 + $0x40] sm:$0xff]
    %v579 = vld [vmem:[#allocation12 + $0x48] sm:$0xff]
    %v580 = vld [vmem:[#allocation12 + $0x50] sm:$0xff]
    %v581 = vld [vmem:[#allocation12 + $0x58] sm:$0xff]
    %v582 = vld [vmem:[#allocation12 + $0x60] sm:$0xff]
    %v583 = vld [vmem:[#allocation12 + $0x68] sm:$0xff]
    %v584 = vld [vmem:[#allocation12 + $0x70] sm:$0xff]
    %v585 = vld [vmem:[#allocation12 + $0x78] sm:$0xff]
    %v586 = vld [vmem:[%s8] sm:$0x1]
    %v588 = vlaneseq
    %v589 = vshrl.u32 %v588, 7
    %v590 = vsub.s32 0, %v589
    %v591 = vrot.slane %v586, %v590
    %593 = vmatprep.subr.mxu0 0.0
    %594 = vmatpush1.msra.mxu0 %v585
    %595 = vmatprep.subr.mxu0 0.0
    %596 = vmatpush1.msra.mxu0 %v584
    %597 = vmatprep.subr.mxu0 0.0
    %598 = vmatpush1.msra.mxu0 %v583
    %599 = vmatprep.subr.mxu0 0.0
    %600 = vmatpush1.msra.mxu0 %v582
    %601 = vmatprep.subr.mxu0 0.0
    %602 = vmatpush1.msra.mxu0 %v581
    %603 = vmatprep.subr.mxu0 0.0
    %604 = vmatpush1.msra.mxu0 %v580
    %605 = vmatprep.subr.mxu0 0.0
    %606 = vmatpush1.msra.mxu0 %v579
    %607 = vmatprep.subr.mxu0 0.0
    %608 = vmatpush1.msra.mxu0 %v578
    %609 = vmatprep.subr.mxu0 0.0
    %610 = vmatpush1.msra.mxu0 %v577
    %611 = vmatprep.subr.mxu0 0.0
    %612 = vmatpush1.msra.mxu0 %v576
    %613 = vmatprep.subr.mxu0 0.0
    %614 = vmatpush1.msra.mxu0 %v575
    %615 = vmatprep.subr.mxu0 0.0
    %616 = vmatpush1.msra.mxu0 %v574
    %617 = vmatprep.subr.mxu0 0.0
    %618 = vmatpush1.msra.mxu0 %v573
    %619 = vmatprep.subr.mxu0 0.0
    %620 = vmatpush1.msra.mxu0 %v572
    %621 = vmatprep.subr.mxu0 0.0
    %622 = vmatpush1.msra.mxu0 %v571
    %623 = vmatprep.subr.mxu0 0.0
    %624 = vmatpush1.msra.mxu0 %v570
    %625 = vmatprep.subr.mxu0 0.0
    %626 = vmatpush2.msra.mxu0 0.0
    %627 = vmatprep.subr.mxu0 0.0
    %628 = vmatpush2.msra.mxu0 0.0
    %629 = vmatprep.subr.mxu0 0.0
    %630 = vmatpush2.msra.mxu0 0.0
    %631 = vmatprep.subr.mxu0 0.0
    %632 = vmatpush2.msra.mxu0 0.0
    %633 = vmatprep.subr.mxu0 0.0
    %634 = vmatpush2.msra.mxu0 0.0
    %635 = vmatprep.subr.mxu0 0.0
    %636 = vmatpush2.msra.mxu0 0.0
    %637 = vmatprep.subr.mxu0 0.0
    %638 = vmatpush2.msra.mxu0 0.0
    %639 = vmatprep.subr.mxu0 0.0
    %640 = vmatpush2.msra.mxu0 0.0
    %641 = vmatprep.subr.mxu0 0.0
    %642 = vmatpush2.msra.mxu0 0.0
    %643 = vmatprep.subr.mxu0 0.0
    %644 = vmatpush2.msra.mxu0 0.0
    %645 = vmatprep.subr.mxu0 0.0
    %646 = vmatpush2.msra.mxu0 0.0
    %647 = vmatprep.subr.mxu0 0.0
    %648 = vmatpush2.msra.mxu0 0.0
    %649 = vmatprep.subr.mxu0 0.0
    %650 = vmatpush2.msra.mxu0 0.0
    %651 = vmatprep.subr.mxu0 0.0
    %652 = vmatpush2.msra.mxu0 0.0
    %653 = vmatprep.subr.mxu0 0.0
    %654 = vmatpush2.msra.mxu0 0.0
    %655 = vmatprep.subr.mxu0 0.0
    %656 = vmatpush2.msra.mxu0 0.0
    %657 = vmatprep.mubr.f32.mxu0 0.0
    %658 = vmatmul.mubr.f32.gmra.mxu0 %v566
    %v659 = vpop.f32.mrf.mxu0
    %v660 = vadd.f32 %v591, %v659
    %v661 = vpop.f32.mrf.mxu0
    %662 = vmatprep.mubr.f32.mxu0 0.0
    %663 = vmatmul.mubr.f32.gmra.mxu0 %v567
    %v664 = vpop.f32.mrf.mxu0
    %v665 = vadd.f32 %v591, %v664
    %v666 = vpop.f32.mrf.mxu0
    %667 = vdwg.mxu0
    %668 = vmax.xlane.f32.xlu0 %v660
    %v669 = vpop.xlane.xlu0 %668
    %670 = vmax.xlane.f32.xlu0 %v665
    %v671 = vpop.xlane.xlu0 %670
    %v672 = vsub.f32 %v660, %v669
    %v673 = vsub.f32 %v665, %v671
    %v674 = vmul.f32 %v672, 1.442695
    %v675 = vpow.pop %v674
    %v676 = vmul.f32 %v673, 1.442695
    %v677 = vpow.pop %v676
    %678 = vadd.xlane.f32.xlu0 %v675
    %v679 = vpop.xlane.xlu0 %678
    %680 = vadd.xlane.f32.xlu0 %v677
    %v681 = vpop.xlane.xlu0 %680
    %v682 = vlog2.pop %v679
    %v683 = vmul.f32 %v682, 0.6931472
    %v684 = vlog2.pop %v681
    %v685 = vmul.f32 %v684, 0.6931472
    %v686 = vsub.f32 %v672, %v683
    %v687 = vsub.f32 %v673, %v685
    %688 = vst [vmem:[#allocation13] sm:$0xff] %v686
    %689 = vst [vmem:[#allocation13 + $0x8] sm:$0xff] %v687
    // Predicated region
    $region62: #{tpu_custom_call.1} parent=1 // pred_check
      _
    $region63: #{tpu_custom_call.1} parent=1 // pred_check_branch
      %691 = sbr.rel (0) target = $region65
    $region64: #{tpu_custom_call.1} parent=1 // pred_region
      %s693 = ssub.s32 256, 256
      %694 = vsyncadd [#allocation4], %s693
      %s695 = sshll.u32 [#allocation13], 4
      %s696 = int_to_ptr.vmem [resolvable:$true] %s695
      %701 = dma.vmem_to_hbm [thread:$0]  %s696, 256, %s9, [#allocation4], 128, 128, 8
    $region65: #{tpu_custom_call.1} parent=1 // pred_fallthru
      _
    // Predicated region
    $region66: #{tpu_custom_call.1} parent=1 // pred_check
      _
    $region67: #{tpu_custom_call.1} parent=1 // pred_check_branch
      %703 = sbr.rel (0) target = $region69
    $region68: #{tpu_custom_call.1} parent=1 // pred_region
      %s705 = ssub.s32 256, 256
      %706 = vsyncadd [#allocation15], %s705
      %s707 = sshll.u32 [#allocation14], 4
      %s708 = int_to_ptr.vmem [resolvable:$true] %s707
      %713 = dma.vmem_to_hbm [thread:$0]  %s708, 256, %s10, [#allocation15], 128, 128, 8
    $region69: #{tpu_custom_call.1} parent=1 // pred_fallthru
      _
    // Predicated region
    $region70: #{tpu_custom_call.1} parent=1 // pred_check
      _
    $region71: #{tpu_custom_call.1} parent=1 // pred_check_branch
      %715 = sbr.rel (0) target = $region73
    $region72: #{tpu_custom_call.1} parent=1 // pred_region
      %716 = dma.done [#allocation4], 256
    $region73: #{tpu_custom_call.1} parent=1 // pred_fallthru
      _
    // Predicated region
    $region74: #{tpu_custom_call.1} parent=1 // pred_check
      _
    $region75: #{tpu_custom_call.1} parent=1 // pred_check_branch
      %718 = sbr.rel (0) target = $region77
    $region76: #{tpu_custom_call.1} parent=1 // pred_region
      %719 = dma.done [#allocation15], 256
    $region77: #{tpu_custom_call.1} parent=1 // pred_fallthru
      _
    %720 = vsyncpa [#allocation3], 1
    %721 = vsyncpa [#allocation8], 1
    %722 = vsyncpa [#allocation11], 1
    %723 = vsyncpa [#allocation4], 1
    %724 = vsyncpa [#allocation15], 1
    %725 = vsyncpa [#allocation5], 1

</llo_original>
